<compile_context>
chip_gen: v7x
topology: tpu7x:2x2x1
jax: 0.10.0
libtpu: 0.0.40
codegen_flags: <defaults>
</compile_context>

<pallas_src>
import functools
import math

import jax
import jax.numpy as jnp
from jax.experimental import pallas as pl
from jax.experimental.pallas import tpu as pltpu


PACKED_WIDTH = 128   # lane-dense packed output width
AEXT_WIDTH = 16      # [anchor(11) | 1 | cached_conf | 0 0 0]


def _pick_tile_n(n, target=128):
    """Largest tile <= target that divides n, preferring multiples of 16
    (bf16 sublane packing), then 8; else fall back to the full extent."""
    if n <= target:
        return n
    for step in (16, 8):
        t = (target // step) * step
        while t >= step:
            if n % t == 0:
                return t
            t -= step
    return n


# ----------------------------------------------------------------------------
# Fused per-frame kernel (one instance tile per grid step):
#   feed-forward + fused cls/reg/qual/feature head + temporal anchor
#   projection + confidence decay/fusion, one lane-dense [TILE_N, 128] store.
# ----------------------------------------------------------------------------
def _fused_frame_kernel(feat_ref, aext_ref, ctx_ref, m_ref, wff_ref, wbig_ref,
                        out_ref, *, num_cls, o_conf, tile_n, num_temp, decay,
                        packed_width):
    # ---- feed-forward over instance features (bf16 MXU, f32 accumulate) ----
    ctx = ctx_ref[0]                                       # [1, E] f32 (per-batch, resident)
    h = jnp.dot(feat_ref[0], wff_ref[...],
                preferred_element_type=jnp.float32) + ctx
    h = jnp.maximum(h, 0.0)                                # ReLU, f32 VPU

    # ---- fused head: h @ [w_cls | w_reg | w_qual | I_E | 0] -> 128 lanes ---
    base = jnp.dot(h.astype(wbig_ref.dtype), wbig_ref[...],
                   preferred_element_type=jnp.float32)     # [tile_n, 128]

    # ---- temporal anchor projection on the MXU, straight into packed lanes -
    # aext = [anchor(11) | 1 | cached_conf | 0 0 0]; m_ref places the
    # projected anchor into both the `pred` lanes (residual) and the
    # `projected_anchor` tail lanes (rows 12..15 of m_ref are zero).
    aext = aext_ref[0]                                     # [tile_n, 16] f32
    packed = base + jnp.dot(aext, m_ref[0],
                            preferred_element_type=jnp.float32)

    # ---- confidence decay / fusion (InstanceBankOE.cache_instance) ---------
    # NOTE: assumes temporal instances occupy the FIRST num_temp rows of the
    # bank; cache() guarantees this by concatenating top-k at the front.
    conf = jax.nn.sigmoid(jnp.max(packed[:, :num_cls], axis=1, keepdims=True))
    cached_conf = aext[:, 12:13]
    inst = (pl.program_id(1) * tile_n
            + jax.lax.broadcasted_iota(jnp.int32, (tile_n, 1), 0))
    conf = jnp.where(inst < num_temp,
                     jnp.maximum(cached_conf * decay, conf), conf)

    # ---- single unmasked 128-wide store; conf merged via one lane select ---
    lane = jax.lax.broadcasted_iota(jnp.int32, (tile_n, packed_width), 1)
    out_ref[0] = jnp.where(lane == o_conf, conf, packed)


def build_anchor_proj_pack(T, dt, o_reg, o_panc, num_anc, packed_width):
    """Per-batch [16, packed_width] affine matrix so that
    [anchor | 1 | conf | 0 0 0] @ pack reproduces InstanceBankOE.anchor_projection
    directly in the packed output lanes (pred residual + projected_anchor tail)."""
    B = T.shape[0]
    R = T[:, :3, :3]
    t = T[:, :3, 3]
    Rt = jnp.swapaxes(R, 1, 2)                               # Rt[j, i] = R[i, j]
    M = jnp.zeros((B, 12, num_anc), jnp.float32)
    M = M.at[:, 0:3, 0:3].set(Rt)                            # rotate center
    M = M.at[:, 8:11, 0:3].set(-dt[:, None, None] * Rt)      # velocity compensation
    M = M.at[:, 11, 0:3].set(t)                              # translation (bias row)
    M = M.at[:, 3, 3].set(1.0)                               # w, l, h pass-through
    M = M.at[:, 4, 4].set(1.0)
    M = M.at[:, 5, 5].set(1.0)
    M = M.at[:, 6, 6].set(R[:, 1, 1])                        # nsin = R10*cos + R11*sin
    M = M.at[:, 7, 6].set(R[:, 1, 0])
    M = M.at[:, 6, 7].set(R[:, 0, 1])                        # ncos = R00*cos + R01*sin
    M = M.at[:, 7, 7].set(R[:, 0, 0])
    M = M.at[:, 8:11, 8:11].set(Rt)                          # rotate velocity
    pack = jnp.zeros((B, AEXT_WIDTH, packed_width), jnp.float32)
    pack = pack.at[:, :12, o_reg:o_reg + num_anc].set(M)
    pack = pack.at[:, :12, o_panc:o_panc + num_anc].set(M)
    return pack


def fused_frame_step(params, img, projection_mat, cached_anchor, cached_feature,
                     cached_confidence, T_temp2cur, time_interval, mask,
                     *, num_cls, num_qual, num_temp, decay):
    """One frame of the ir_model + instance-bank math in one pallas_call."""
    B, C, H, W = img.shape
    _, N, A = cached_anchor.shape
    E = cached_feature.shape[-1]
    P = params["w_big"].shape[1]

    o_reg = num_cls
    o_qual = o_reg + A
    o_feat = o_qual + num_qual
    o_conf = o_feat + E
    o_panc = o_conf + 1
    assert o_panc + A <= P, "packed output slab too narrow"

    # ---- image / projection-mat context: tiny, stays in XLA (keeps the big
    # image DMA out of the kernel working set; XLA pipelines the reduce) -----
    pooled = jnp.mean(img.reshape(B, C, H * W).astype(jnp.float32), axis=2)
    pm_flat = projection_mat.reshape(B, -1).astype(jnp.float32)
    ctx = (jnp.concatenate([pooled, pm_flat], axis=1) @ params["w_ctx"]
           + params["b_ff"])[:, None, :]                              # [B, 1, E]

    # ---- stale-frame masking + per-batch projection matrix -----------------
    # TODO(synk): the exact stale-frame reset policy lives in the opaque
    # ir_model / InstanceBankOE; here stale frames simply get dt = 0.
    dt = jnp.where(mask, time_interval.astype(jnp.float32), 0.0)
    m_pack = build_anchor_proj_pack(T_temp2cur.astype(jnp.float32), dt,
                                    o_reg, o_panc, A, P)              # [B,16,P]

    # ---- per-row anchor slab: [anchor(11) | 1 | cached_conf | 0 0 0] -------
    aext = jnp.concatenate(
        [cached_anchor.astype(jnp.float32),
         jnp.ones((B, N, 1), jnp.float32),
         cached_confidence[:, :N].astype(jnp.float32)[..., None],
         jnp.zeros((B, N, AEXT_WIDTH - A - 2), jnp.float32)],
        axis=-1)                                                      # [B,N,16]

    feat = cached_feature.astype(params["w_ff"].dtype)                # [B,N,E] bf16

    tile_n = _pick_tile_n(N)
    grid = (B, N // tile_n)

    kernel = functools.partial(
        _fused_frame_kernel, num_cls=num_cls, o_conf=o_conf, tile_n=tile_n,
        num_temp=int(num_temp), decay=float(decay), packed_width=P)

    # NOTE: leave vmem_limit_bytes at the default; re-derive tile_n against
    # 64 MiB physical when scaling N/E up on v7x.
    packed = pl.pallas_call(
        kernel,
        out_shape=jax.ShapeDtypeStruct((B, N, P), jnp.float32),
        grid_spec=pltpu.PrefetchScalarGridSpec(
            num_scalar_prefetch=0,
            grid=grid,
            in_specs=[
                pl.BlockSpec((1, tile_n, E), lambda b, n: (b, n, 0)),          # feat
                pl.BlockSpec((1, tile_n, AEXT_WIDTH), lambda b, n: (b, n, 0)),  # aext
                pl.BlockSpec((1, 1, E), lambda b, n: (b, 0, 0)),               # ctx
                pl.BlockSpec((1, AEXT_WIDTH, P), lambda b, n: (b, 0, 0)),      # m_pack
                pl.BlockSpec((E, E), lambda b, n: (0, 0)),                     # w_ff
                pl.BlockSpec((E, P), lambda b, n: (0, 0)),                     # w_big
            ],
            out_specs=pl.BlockSpec((1, tile_n, P), lambda b, n: (b, n, 0)),
        ),
        compiler_params=pltpu.CompilerParams(
            dimension_semantics=("parallel", "parallel")),
    )(feat, aext, ctx, m_pack, params["w_ff"], params["w_big"])

    return {
        "classification": packed[:, :, :num_cls],
        "prediction": packed[:, :, o_reg:o_qual],
        "quality": packed[:, :, o_qual:o_feat],
        "feature": packed[:, :, o_feat:o_conf],
        "fused_confidence": packed[:, :, o_conf],
        "projected_anchor": packed[:, :, o_panc:o_panc + A],
    }


# ----------------------------------------------------------------------------
# Plain-JAX glue (matrix composition, top-k selection, decoder post-processing)
# ----------------------------------------------------------------------------
def gen_projection_mat(projection_mat_key, metas):
    # SparseBEVOEHead.gen_projection_mat composes calibration matrices; here
    # the pre-composed [B, V, 4, 4] matrix is taken directly.
    return metas[projection_mat_key].astype(jnp.float32)


def gen_temp2cur(gobel_mat_key, prev_metas, cur_metas):
    # T_temp2cur = inv(ego2global_cur) @ ego2global_prev  (per-batch 4x4)
    prev_g = prev_metas[gobel_mat_key].astype(jnp.float32)
    cur_g = cur_metas[gobel_mat_key].astype(jnp.float32)
    return jnp.einsum("bij,bjk->bik", jnp.linalg.inv(cur_g), prev_g)


def decode(classification, prediction, quality, num_output=10):
    # TODO(synk): real decoder module is external; simple sigmoid + top-k here.
    B, N, C = classification.shape
    scores = jax.nn.sigmoid(classification).reshape(B, N * C)
    top_scores, top_idx = jax.lax.top_k(scores, num_output)
    inst = top_idx // C
    labels = top_idx % C
    boxes = jnp.take_along_axis(prediction, inst[..., None], axis=1)
    qual = jnp.take_along_axis(quality, inst[..., None], axis=1)
    return {"scores": top_scores, "labels": labels, "boxes": boxes,
            "quality": qual}


def build_params(key, C, num_views, E, num_cls, num_anc, num_qual,
                 packed_width=PACKED_WIDTH):
    ks = jax.random.split(key, 6)
    w_img = 0.1 * jax.random.normal(ks[0], (C, E), jnp.float32)
    w_proj = 0.1 * jax.random.normal(ks[1], (num_views * 16, E), jnp.float32)
    w_cls = 0.1 * jax.random.normal(ks[3], (E, num_cls), jnp.float32)
    w_reg = 0.01 * jax.random.normal(ks[4], (E, num_anc), jnp.float32)
    w_qual = 0.1 * jax.random.normal(ks[5], (E, num_qual), jnp.float32)
    # fused head weight: [w_cls | w_reg | w_qual | I_E (feature pass-through) | 0]
    w_big = jnp.zeros((E, packed_width), jnp.float32)
    w_big = w_big.at[:, :num_cls].set(w_cls)
    w_big = w_big.at[:, num_cls:num_cls + num_anc].set(w_reg)
    w_big = w_big.at[:, num_cls + num_anc:num_cls + num_anc + num_qual].set(w_qual)
    o_feat = num_cls + num_anc + num_qual
    w_big = w_big.at[:, o_feat:o_feat + E].set(jnp.eye(E, dtype=jnp.float32))
    return {
        # context weight: [pooled_img | projection_mat] -> E
        "w_ctx": jnp.concatenate([w_img, w_proj], axis=0),
        "b_ff": jnp.zeros((1, E), jnp.float32),
        "w_ff": (0.1 * jax.random.normal(ks[2], (E, E), jnp.float32)
                 ).astype(jnp.bfloat16),
        "w_big": w_big.astype(jnp.bfloat16),
    }


# ----------------------------------------------------------------------------
# The module
# ----------------------------------------------------------------------------
class SparseBEVOEIrInfer:
    def __init__(self, params, projection_mat_key, gobel_mat_key,
                 first_frame_input, num_cls, num_qual,
                 max_time_interval=2.0, use_memory_bank=True,
                 confidence_decay=0.6, num_temp_instances=8,
                 num_memory_instances=24):
        assert num_temp_instances <= num_memory_instances
        self.params = params
        self.projection_mat_key = projection_mat_key
        self.gobel_mat_key = gobel_mat_key
        self.first_frame_input = first_frame_input
        self.max_time_interval = max_time_interval
        self.use_memory_bank = use_memory_bank
        self.confidence_decay = confidence_decay
        self.num_temp_instances = num_temp_instances
        self.num_memory_instances = num_memory_instances
        self.metas = None
        self.mask = None
        # one jitted, fused frame step (statics baked in; params stay arrays)
        self._step = jax.jit(functools.partial(
            fused_frame_step, num_cls=num_cls, num_qual=num_qual,
            num_temp=num_temp_instances, decay=confidence_decay))

    def cache(self, metas, data):
        conf = data["fused_confidence"]          # already decayed/fused in-kernel
        anchor = data["prediction"]
        instance_feature = data["feature"]
        # top-k goes to the FRONT of the bank -> temporal rows are 0..num_temp-1,
        # which the in-kernel confidence-fusion gate relies on.
        top_conf, top_idx = jax.lax.top_k(conf, self.num_temp_instances)
        feat_k = jnp.take_along_axis(instance_feature, top_idx[..., None], axis=1)
        anc_k = jnp.take_along_axis(anchor, top_idx[..., None], axis=1)
        self.metas = metas
        if self.use_memory_bank:
            self.cached_confidence = jnp.concatenate(
                [top_conf, self.cached_confidence],
                axis=1)[:, :self.num_memory_instances]
            self.cached_feature = jnp.concatenate(
                [feat_k, self.cached_feature],
                axis=1)[:, :self.num_memory_instances]
            self.cached_anchor = jnp.concatenate(
                [anc_k, self.cached_anchor],
                axis=1)[:, :self.num_memory_instances]
        else:
            self.cached_confidence = top_conf
            self.cached_feature = feat_k
            self.cached_anchor = anc_k

    def forward(self, metas):
        img = metas["img"]
        projection_mat = gen_projection_mat(self.projection_mat_key, metas)
        B = img.shape[0]
        if self.metas is None:
            for k, v in self.first_frame_input.items():
                setattr(self, k, v)
            # identity transform + zero dt -> anchor projection is an exact no-op
            T_temp2cur = jnp.tile(jnp.eye(4, dtype=jnp.float32)[None], (B, 1, 1))
            time_interval = jnp.zeros((B,), jnp.float32)
            self.mask = jnp.ones((B,), dtype=jnp.bool_)
        else:
            time_interval = (metas["timestamp"]
                             - self.metas["timestamp"]).astype(jnp.float32)
            self.mask = jnp.abs(time_interval) <= self.max_time_interval
            T_temp2cur = gen_temp2cur(self.gobel_mat_key, self.metas, metas)

        outs = self._step(self.params, img, projection_mat,
                          self.cached_anchor, self.cached_feature,
                          self.cached_confidence, T_temp2cur, time_interval,
                          self.mask)
        # The ir_model consumed the temporally projected anchors; keep them as
        # the bank state (matches the reference, which updates cached_anchor
        # before ir_model / cache()).
        self.cached_anchor = outs["projected_anchor"]
        self.cache(metas, outs)
        return decode(outs["classification"], outs["prediction"],
                      outs["quality"])


# ----------------------------------------------------------------------------
# Main
# ----------------------------------------------------------------------------
if __name__ == "__main__":
    B, C, H, W, V = 2, 3, 16, 16, 2
    E, NMEM, NTEMP, A, NCLS, NQ = 32, 24, 8, 11, 4, 2

    key = jax.random.PRNGKey(0)
    kp, kf1, kf2, kf3, km0, km1 = jax.random.split(key, 6)

    params = build_params(kp, C, V, E, NCLS, A, NQ)

    first_frame_input = {
        "cached_anchor": jax.random.normal(kf1, (B, NMEM, A), jnp.float32),
        "cached_feature": jax.random.normal(kf2, (B, NMEM, E), jnp.float32),
        "cached_confidence": jax.nn.sigmoid(
            jax.random.normal(kf3, (B, NMEM), jnp.float32)),
    }

    model = SparseBEVOEIrInfer(
        params, projection_mat_key="lidar2img", gobel_mat_key="ego2global",
        first_frame_input=first_frame_input, num_cls=NCLS, num_qual=NQ,
        max_time_interval=2.0, use_memory_bank=True, confidence_decay=0.6,
        num_temp_instances=NTEMP, num_memory_instances=NMEM)

    def make_meta(kimg, ts, yaw, tx):
        img = jax.random.normal(kimg, (B, C, H, W), jnp.float32)
        proj = jnp.tile(jnp.eye(4, dtype=jnp.float32)[None, None], (B, V, 1, 1))
        c, s = math.cos(yaw), math.sin(yaw)
        g = jnp.array([[c, -s, 0.0, tx],
                       [s, c, 0.0, 0.0],
                       [0.0, 0.0, 1.0, 0.0],
                       [0.0, 0.0, 0.0, 1.0]], jnp.float32)
        glob = jnp.tile(g[None], (B, 1, 1))
        return {"img": img, "lidar2img": proj, "ego2global": glob,
                "timestamp": jnp.full((B,), ts, jnp.float32)}

    meta0 = make_meta(km0, 0.0, 0.0, 0.0)
    meta1 = make_meta(km1, 0.5, 0.1, 1.0)

    res0 = model.forward(meta0)   # first frame (uses first_frame_input)
    res1 = model.forward(meta1)   # second frame (exercises anchor projection)

    jax.block_until_ready((res0, res1))
    print("KERNEL_OK")
</pallas_src>

<mosaic_0001>
module attributes {stable_mosaic.version = 11 : i64} {
  func.func @_fused_frame_kernel(%arg0: i32, %arg1: i32, %arg2: memref<1x24x32xbf16, #tpu.memory_space<vmem>>, %arg3: memref<1x24x16xf32, #tpu.memory_space<vmem>>, %arg4: memref<1x1x32xf32, #tpu.memory_space<vmem>>, %arg5: memref<1x16x128xf32, #tpu.memory_space<vmem>>, %arg6: memref<32x32xbf16, #tpu.memory_space<vmem>>, %arg7: memref<32x128xbf16, #tpu.memory_space<vmem>>, %arg8: memref<1x24x128xf32, #tpu.memory_space<vmem>>) attributes {dimension_semantics = [#tpu.dimension_semantics<parallel>, #tpu.dimension_semantics<parallel>], iteration_bounds = array<i64: 2, 1>, scalar_prefetch = 0 : i64, scratch_operands = 0 : i64, tpu.core_type = #tpu.core_type<tc>, window_params = [{transform_indices = @transform_0, window_bounds = array<i64: 1, 24, 32>}, {transform_indices = @transform_1, window_bounds = array<i64: 1, 24, 16>}, {transform_indices = @transform_2, window_bounds = array<i64: 1, 1, 32>}, {transform_indices = @transform_3, window_bounds = array<i64: 1, 16, 128>}, {pipeline_mode = #tpu.pipeline_mode<synchronous>, transform_indices = @transform_4, window_bounds = array<i64: 32, 32>}, {pipeline_mode = #tpu.pipeline_mode<synchronous>, transform_indices = @transform_5, window_bounds = array<i64: 32, 128>}, {transform_indices = @transform_6, window_bounds = array<i64: 1, 24, 128>}]} {
    %c0 = arith.constant 0 : index
    %c0_0 = arith.constant 0 : index
    %c0_1 = arith.constant 0 : index
    %0 = vector.load %arg4[%c0, %c0_0, %c0_1] : memref<1x1x32xf32, #tpu.memory_space<vmem>>, vector<1x1x32xf32>
    %1 = vector.shape_cast %0 : vector<1x1x32xf32> to vector<1x32xf32>
    %c0_2 = arith.constant 0 : index
    %c0_3 = arith.constant 0 : index
    %c0_4 = arith.constant 0 : index
    %2 = vector.load %arg2[%c0_2, %c0_3, %c0_4] : memref<1x24x32xbf16, #tpu.memory_space<vmem>>, vector<1x24x32xbf16>
    %3 = vector.shape_cast %2 : vector<1x24x32xbf16> to vector<24x32xbf16>
    %c0_5 = arith.constant 0 : index
    %c0_6 = arith.constant 0 : index
    %4 = vector.load %arg6[%c0_5, %c0_6] : memref<32x32xbf16, #tpu.memory_space<vmem>>, vector<32x32xbf16>
    %cst = arith.constant dense<0.000000e+00> : vector<24x32xf32>
    %5 = tpu.matmul %3, %4, %cst {dimension_numbers = #tpu.dot_dimension_numbers<[1], [0], [0], [1], [0, 0, 1, 1], [], []>} : vector<24x32xbf16>, vector<32x32xbf16>, vector<24x32xf32> -> vector<24x32xf32>
    %6 = vector.broadcast %1 : vector<1x32xf32> to vector<24x32xf32>
    %7 = arith.addf %5, %6 : vector<24x32xf32>
    %cst_7 = arith.constant 0.000000e+00 : f32
    %8 = vector.broadcast %cst_7 : f32 to vector<24x32xf32>
    %9 = arith.maximumf %7, %8 : vector<24x32xf32>
    %10 = arith.truncf %9 : vector<24x32xf32> to vector<24x32xbf16>
    %c0_8 = arith.constant 0 : index
    %c0_9 = arith.constant 0 : index
    %11 = vector.load %arg7[%c0_8, %c0_9] : memref<32x128xbf16, #tpu.memory_space<vmem>>, vector<32x128xbf16>
    %cst_10 = arith.constant dense<0.000000e+00> : vector<24x128xf32>
    %12 = tpu.matmul %10, %11, %cst_10 {dimension_numbers = #tpu.dot_dimension_numbers<[1], [0], [0], [1], [0, 0, 1, 1], [], []>} : vector<24x32xbf16>, vector<32x128xbf16>, vector<24x128xf32> -> vector<24x128xf32>
    %c0_11 = arith.constant 0 : index
    %c0_12 = arith.constant 0 : index
    %c0_13 = arith.constant 0 : index
    %13 = vector.load %arg3[%c0_11, %c0_12, %c0_13] : memref<1x24x16xf32, #tpu.memory_space<vmem>>, vector<1x24x16xf32>
    %14 = vector.shape_cast %13 : vector<1x24x16xf32> to vector<24x16xf32>
    %c0_14 = arith.constant 0 : index
    %c0_15 = arith.constant 0 : index
    %c0_16 = arith.constant 0 : index
    %15 = vector.load %arg5[%c0_14, %c0_15, %c0_16] : memref<1x16x128xf32, #tpu.memory_space<vmem>>, vector<1x16x128xf32>
    %16 = vector.shape_cast %15 : vector<1x16x128xf32> to vector<16x128xf32>
    %cst_17 = arith.constant dense<0.000000e+00> : vector<24x128xf32>
    %17 = tpu.matmul %14, %16, %cst_17 {dimension_numbers = #tpu.dot_dimension_numbers<[1], [0], [0], [1], [0, 0, 1, 1], [], []>} : vector<24x16xf32>, vector<16x128xf32>, vector<24x128xf32> -> vector<24x128xf32>
    %18 = arith.addf %12, %17 : vector<24x128xf32>
    %19 = vector.extract_strided_slice %18 {offsets = [0, 0], sizes = [24, 4], strides = [1, 1]} : vector<24x128xf32> to vector<24x4xf32>
    %cst_18 = arith.constant dense<0xFF800000> : vector<24xf32>
    %20 = vector.multi_reduction <maximumf>, %19, %cst_18 [1] : vector<24x4xf32> to vector<24xf32>
    %21 = vector.shape_cast %20 : vector<24xf32> to vector<24x1xf32>
    %22 = arith.negf %21 : vector<24x1xf32>
    %23 = math.exp %22 : vector<24x1xf32>
    %cst_19 = arith.constant 1.000000e+00 : f32
    %24 = vector.broadcast %cst_19 : f32 to vector<24x1xf32>
    %25 = arith.addf %24, %23 : vector<24x1xf32>
    %26 = arith.divf %24, %25 : vector<24x1xf32>
    %27 = vector.extract_strided_slice %14 {offsets = [0, 12], sizes = [24, 1], strides = [1, 1]} : vector<24x16xf32> to vector<24x1xf32>
    %c24_i32 = arith.constant 24 : i32
    %28 = arith.muli %arg1, %c24_i32 : i32
    %29 = tpu.iota {dimensions = array<i32: 0>} : vector<24x1xi32>
    %30 = vector.broadcast %28 : i32 to vector<24x1xi32>
    %31 = arith.addi %30, %29 : vector<24x1xi32>
    %c8_i32 = arith.constant 8 : i32
    %32 = vector.broadcast %c8_i32 : i32 to vector<24x1xi32>
    %33 = arith.cmpi slt, %31, %32 : vector<24x1xi32>
    %cst_20 = arith.constant 6.000000e-01 : f32
    %34 = vector.broadcast %cst_20 : f32 to vector<24x1xf32>
    %35 = arith.mulf %27, %34 : vector<24x1xf32>
    %36 = arith.maximumf %35, %26 : vector<24x1xf32>
    %37 = arith.select %33, %36, %26 : vector<24x1xi1>, vector<24x1xf32>
    %38 = tpu.iota {dimensions = array<i32: 1>} : vector<24x128xi32>
    %c49_i32 = arith.constant 49 : i32
    %39 = vector.broadcast %c49_i32 : i32 to vector<24x128xi32>
    %40 = arith.cmpi eq, %38, %39 : vector<24x128xi32>
    %41 = vector.shape_cast %37 : vector<24x1xf32> to vector<24x1xf32>
    %42 = vector.broadcast %41 : vector<24x1xf32> to vector<24x128xf32>
    %43 = arith.select %40, %42, %18 : vector<24x128xi1>, vector<24x128xf32>
    %c0_21 = arith.constant 0 : index
    %c0_22 = arith.constant 0 : index
    %c0_23 = arith.constant 0 : index
    %44 = vector.load %arg8[%c0_21, %c0_22, %c0_23] : memref<1x24x128xf32, #tpu.memory_space<vmem>>, vector<1x24x128xf32>
    %45 = vector.shape_cast %44 : vector<1x24x128xf32> to vector<24x128xf32>
    %46 = vector.shape_cast %43 : vector<24x128xf32> to vector<1x24x128xf32>
    tpu.vector_store %arg8[%c0_21, %c0_22, %c0_23], %46 {strides = array<i32>} : memref<1x24x128xf32, #tpu.memory_space<vmem>>, vector<1x24x128xf32>,
    return
  }
  func.func @transform_0(%arg0: i32, %arg1: i32) -> (i32, i32, i32) {
    %c0_i32 = arith.constant 0 : i32
    %c0_i32_0 = arith.constant 0 : i32
    return %arg0, %arg1, %c0_i32 : i32, i32, i32
  }
  func.func @transform_1(%arg0: i32, %arg1: i32) -> (i32, i32, i32) {
    %c0_i32 = arith.constant 0 : i32
    %c0_i32_0 = arith.constant 0 : i32
    return %arg0, %arg1, %c0_i32 : i32, i32, i32
  }
  func.func @transform_2(%arg0: i32, %arg1: i32) -> (i32, i32, i32) {
    %c0_i32 = arith.constant 0 : i32
    %c0_i32_0 = arith.constant 0 : i32
    %c0_i32_1 = arith.constant 0 : i32
    return %arg0, %c0_i32, %c0_i32_0 : i32, i32, i32
  }
  func.func @transform_3(%arg0: i32, %arg1: i32) -> (i32, i32, i32) {
    %c0_i32 = arith.constant 0 : i32
    %c0_i32_0 = arith.constant 0 : i32
    %c0_i32_1 = arith.constant 0 : i32
    return %arg0, %c0_i32, %c0_i32_0 : i32, i32, i32
  }
  func.func @transform_4(%arg0: i32, %arg1: i32) -> (i32, i32) {
    %c0_i32 = arith.constant 0 : i32
    %c0_i32_0 = arith.constant 0 : i32
    %c0_i32_1 = arith.constant 0 : i32
    return %c0_i32, %c0_i32_0 : i32, i32
  }
  func.func @transform_5(%arg0: i32, %arg1: i32) -> (i32, i32) {
    %c0_i32 = arith.constant 0 : i32
    %c0_i32_0 = arith.constant 0 : i32
    %c0_i32_1 = arith.constant 0 : i32
    return %c0_i32, %c0_i32_0 : i32, i32
  }
  func.func @transform_6(%arg0: i32, %arg1: i32) -> (i32, i32, i32) {
    %c0_i32 = arith.constant 0 : i32
    %c0_i32_0 = arith.constant 0 : i32
    return %arg0, %arg1, %c0_i32 : i32, i32, i32
  }
}

</mosaic_0001>

<llo_original>
// kernel: fused_frame_step.1
$region0: #{fused_frame_step.1}
  #allocation0 [shape = 'u32[]', space=smem, size = 0x4, offset = 0x4, fixed_abs, tag = 'smem constant byte address 0x4 - core index']
  #allocation1 [shape = 'u32[144,128]{1,0:T(1,128)}', space=vmem, size = 0x12000, scoped, tag = 'internal scratch']
  %s0 = inlined_call_operand.vmem [shape: bf16[2,24,32], index: 0, kind: input, shape index: {}]
  %s1 = inlined_call_operand.vmem [shape: f32[2,24,16], index: 1, kind: input, shape index: {}]
  %s2 = inlined_call_operand.vmem [shape: f32[2,1,32], index: 2, kind: input, shape index: {}]
  %s3 = inlined_call_operand.vmem [shape: f32[2,16,128], index: 3, kind: input, shape index: {}]
  %s4 = inlined_call_operand.vmem [shape: bf16[32,32], index: 4, kind: input, shape index: {}]
  %s5 = inlined_call_operand.vmem [shape: bf16[32,128], index: 5, kind: input, shape index: {}]
  %s6 = inlined_call_operand.vmem [shape: f32[2,24,128], index: 6, kind: output, shape index: {}]
  %s7 = sld [smem:[#allocation0]]
  $region57: #{fused_frame_step.1} parent=0
    _
  %s9 = ssub.s32 1, %s7
  %s10 = scalar_select 0, %s9, %s7
  loop: start=0, step=1, limit=4
  $region2: #{fused_frame_step.1} parent=0 // loop_pre_header
    _
  $region3: #{fused_frame_step.1} parent=0 // loop_header
    %s12 = sphi 0, %s16
    %p13 = scmp.ge.s32.totalorder %s12, 4
    %s19 = sphi 0, %s31
    %s20 = sphi 0, %s27
    %s21 = sphi 0, %s19
    %s22 = sphi 0, %s20
    %s23 = sphi 0, %s21
    %s24 = sphi 0, %s22
    %s36 = sphi 0, %s38
    %s39 = sphi 0, %s36
    %s40 = sphi 0, %s39
    %s56 = sphi 0, %s40
    %s64 = sphi 0, %s66
    %s67 = sphi 0, %s64
    %s68 = sphi 0, %s67
    %s84 = sphi 0, %s68
    %s90 = sphi 0, %s92
    %s93 = sphi 0, %s90
    %s94 = sphi 0, %s93
    %s110 = sphi 0, %s94
    %s116 = sphi 0, %s118
    %s119 = sphi 0, %s116
    %s120 = sphi 0, %s119
    %s136 = sphi 0, %s120
    %s140 = sphi 0, %s140
    %s142 = sphi 0, %s140
    %s143 = sphi 0, %s142
    %s157 = sphi 0, %s143
    %s161 = sphi 0, %s161
    %s163 = sphi 0, %s161
    %s164 = sphi 0, %s163
    %s178 = sphi 0, %s164
    %s186 = sphi 0, %s188
    %s189 = sphi 0, %s186
    %s190 = sphi 0, %s189
    %s206 = sphi 0, %s190
  $region4: #{fused_frame_step.1} parent=0 // loop_header_branch
    %15 = sbr.rel (%p13) target = $region8
  $region5: #{fused_frame_step.1} parent=0 // loop_body
    %s17 = ssub.s32 %s12, 1
    %s18 = ssub.s32 %s12, 2
    %s25 = sadd.s32 1, %s20
    %p26 = scmp.ge.s32.totalorder %s25, 1
    %s27 = scalar_select %p26, 0, %s25
    %s28 = sadd.s32 1, %s19
    %s29 = scalar_select %p26, %s28, %s19
    %p30 = scmp.ge.s32.totalorder %s29, 2
    %s31 = scalar_select %p30, 0, %s29
    %s32 = ssub.s32 %s19, %s31
    %s33 = ssub.s32 %s20, %s27
    %s34 = sor.u32 %s32, %s33
    %p35 = scmp.eq.s32.totalorder %s34, 0
    %s37 = sadd.s32 %s36, 1
    %s38 = scalar_select %p35, %s36, %s37
    %p41 = pneg %p35
    %p42 = scmp.eq.s32.totalorder %s12, 1
    %p43 = por %p41, %p42
    %p44 = scmp.ne.s32.totalorder %s36, %s39
    %p45 = scmp.eq.s32.totalorder %s12, 0
    %p46 = por %p44, %p45
    %p47 = scmp.ne.s32.totalorder %s36, %s39
    %p48 = scmp.eq.s32.totalorder %s17, 1
    %p49 = por %p47, %p48
    %p50 = scmp.ne.s32.totalorder %s39, %s40
    %p51 = scmp.eq.s32.totalorder %s17, 0
    %p52 = por %p50, %p51
    %p53 = scmp.ne.s32.totalorder %s39, %s40
    %p54 = scmp.eq.s32.totalorder %s18, 1
    %p55 = por %p53, %p54
    %p57 = scmp.ne.s32.totalorder %s40, %s56
    %p58 = scmp.eq.s32.totalorder %s18, 0
    %p59 = por %p57, %p58
    %s60 = ssub.s32 %s19, %s31
    %s61 = ssub.s32 %s20, %s27
    %s62 = sor.u32 %s60, %s61
    %p63 = scmp.eq.s32.totalorder %s62, 0
    %s65 = sadd.s32 %s64, 1
    %s66 = scalar_select %p63, %s64, %s65
    %p69 = pneg %p63
    %p70 = scmp.eq.s32.totalorder %s12, 1
    %p71 = por %p69, %p70
    %p72 = scmp.ne.s32.totalorder %s64, %s67
    %p73 = scmp.eq.s32.totalorder %s12, 0
    %p74 = por %p72, %p73
    %p75 = scmp.ne.s32.totalorder %s64, %s67
    %p76 = scmp.eq.s32.totalorder %s17, 1
    %p77 = por %p75, %p76
    %p78 = scmp.ne.s32.totalorder %s67, %s68
    %p79 = scmp.eq.s32.totalorder %s17, 0
    %p80 = por %p78, %p79
    %p81 = scmp.ne.s32.totalorder %s67, %s68
    %p82 = scmp.eq.s32.totalorder %s18, 1
    %p83 = por %p81, %p82
    %p85 = scmp.ne.s32.totalorder %s68, %s84
    %p86 = scmp.eq.s32.totalorder %s18, 0
    %p87 = por %p85, %p86
    %s88 = ssub.s32 %s19, %s31
    %p89 = scmp.eq.s32.totalorder %s88, 0
    %s91 = sadd.s32 %s90, 1
    %s92 = scalar_select %p89, %s90, %s91
    %p95 = pneg %p89
    %p96 = scmp.eq.s32.totalorder %s12, 1
    %p97 = por %p95, %p96
    %p98 = scmp.ne.s32.totalorder %s90, %s93
    %p99 = scmp.eq.s32.totalorder %s12, 0
    %p100 = por %p98, %p99
    %p101 = scmp.ne.s32.totalorder %s90, %s93
    %p102 = scmp.eq.s32.totalorder %s17, 1
    %p103 = por %p101, %p102
    %p104 = scmp.ne.s32.totalorder %s93, %s94
    %p105 = scmp.eq.s32.totalorder %s17, 0
    %p106 = por %p104, %p105
    %p107 = scmp.ne.s32.totalorder %s93, %s94
    %p108 = scmp.eq.s32.totalorder %s18, 1
    %p109 = por %p107, %p108
    %p111 = scmp.ne.s32.totalorder %s94, %s110
    %p112 = scmp.eq.s32.totalorder %s18, 0
    %p113 = por %p111, %p112
    %s114 = ssub.s32 %s19, %s31
    %p115 = scmp.eq.s32.totalorder %s114, 0
    %s117 = sadd.s32 %s116, 1
    %s118 = scalar_select %p115, %s116, %s117
    %p121 = pneg %p115
    %p122 = scmp.eq.s32.totalorder %s12, 1
    %p123 = por %p121, %p122
    %p124 = scmp.ne.s32.totalorder %s116, %s119
    %p125 = scmp.eq.s32.totalorder %s12, 0
    %p126 = por %p124, %p125
    %p127 = scmp.ne.s32.totalorder %s116, %s119
    %p128 = scmp.eq.s32.totalorder %s17, 1
    %p129 = por %p127, %p128
    %p130 = scmp.ne.s32.totalorder %s119, %s120
    %p131 = scmp.eq.s32.totalorder %s17, 0
    %p132 = por %p130, %p131
    %p133 = scmp.ne.s32.totalorder %s119, %s120
    %p134 = scmp.eq.s32.totalorder %s18, 1
    %p135 = por %p133, %p134
    %p137 = scmp.ne.s32.totalorder %s120, %s136
    %p138 = scmp.eq.s32.totalorder %s18, 0
    %p139 = por %p137, %p138
    %s141 = sadd.s32 %s140, 1
    %p144 = scmp.eq.s32.totalorder %s12, 1
    %p145 = scmp.ne.s32.totalorder %s140, %s142
    %p146 = scmp.eq.s32.totalorder %s12, 0
    %p147 = por %p145, %p146
    %p148 = scmp.ne.s32.totalorder %s140, %s142
    %p149 = scmp.eq.s32.totalorder %s17, 1
    %p150 = por %p148, %p149
    %p151 = scmp.ne.s32.totalorder %s142, %s143
    %p152 = scmp.eq.s32.totalorder %s17, 0
    %p153 = por %p151, %p152
    %p154 = scmp.ne.s32.totalorder %s142, %s143
    %p155 = scmp.eq.s32.totalorder %s18, 1
    %p156 = por %p154, %p155
    %p158 = scmp.ne.s32.totalorder %s143, %s157
    %p159 = scmp.eq.s32.totalorder %s18, 0
    %p160 = por %p158, %p159
    %s162 = sadd.s32 %s161, 1
    %p165 = scmp.eq.s32.totalorder %s12, 1
    %p166 = scmp.ne.s32.totalorder %s161, %s163
    %p167 = scmp.eq.s32.totalorder %s12, 0
    %p168 = por %p166, %p167
    %p169 = scmp.ne.s32.totalorder %s161, %s163
    %p170 = scmp.eq.s32.totalorder %s17, 1
    %p171 = por %p169, %p170
    %p172 = scmp.ne.s32.totalorder %s163, %s164
    %p173 = scmp.eq.s32.totalorder %s17, 0
    %p174 = por %p172, %p173
    %p175 = scmp.ne.s32.totalorder %s163, %s164
    %p176 = scmp.eq.s32.totalorder %s18, 1
    %p177 = por %p175, %p176
    %p179 = scmp.ne.s32.totalorder %s164, %s178
    %p180 = scmp.eq.s32.totalorder %s18, 0
    %p181 = por %p179, %p180
    %s182 = ssub.s32 %s19, %s31
    %s183 = ssub.s32 %s20, %s27
    %s184 = sor.u32 %s182, %s183
    %p185 = scmp.eq.s32.totalorder %s184, 0
    %s187 = sadd.s32 %s186, 1
    %s188 = scalar_select %p185, %s186, %s187
    %p191 = pneg %p185
    %p192 = scmp.eq.s32.totalorder %s12, 1
    %p193 = por %p191, %p192
    %p194 = scmp.ne.s32.totalorder %s186, %s189
    %p195 = scmp.eq.s32.totalorder %s12, 0
    %p196 = por %p194, %p195
    %p197 = scmp.ne.s32.totalorder %s186, %s189
    %p198 = scmp.eq.s32.totalorder %s17, 1
    %p199 = por %p197, %p198
    %p200 = scmp.ne.s32.totalorder %s189, %s190
    %p201 = scmp.eq.s32.totalorder %s17, 0
    %p202 = por %p200, %p201
    %p203 = scmp.ne.s32.totalorder %s189, %s190
    %p204 = scmp.eq.s32.totalorder %s18, 1
    %p205 = por %p203, %p204
    %p207 = scmp.ne.s32.totalorder %s190, %s206
    %p208 = scmp.eq.s32.totalorder %s18, 0
    %p209 = por %p207, %p208
    %p210 = scmp.le.s32.totalorder 1, %s12
    %p211 = scmp.lt.s32.totalorder %s12, 3
    %p212 = pnand %p210, %p211
    %p213 = pneg %p212
    // Predicated region
    $region9: #{fused_frame_step.1} parent=5 // pred_check
      _
    $region10: #{fused_frame_step.1} parent=5 // pred_check_branch
      %215 = sbr.rel (%p212) target = $region12
    $region11: #{fused_frame_step.1} parent=5 // pred_region
      %s216 = ssub.s32 %s12, 1
      // Predicated region
      $region13: #{fused_frame_step.1} parent=11 // pred_check
        %p217 = pneg %p153
      $region14: #{fused_frame_step.1} parent=11 // pred_check_branch
        %219 = sbr.rel (%p217) target = $region16
      $region15: #{fused_frame_step.1} parent=11 // pred_region
        _
      $region16: #{fused_frame_step.1} parent=11 // pred_fallthru
        _
      // Predicated region
      $region17: #{fused_frame_step.1} parent=11 // pred_check
        %p220 = pneg %p174
      $region18: #{fused_frame_step.1} parent=11 // pred_check_branch
        %222 = sbr.rel (%p220) target = $region20
      $region19: #{fused_frame_step.1} parent=11 // pred_region
        _
      $region20: #{fused_frame_step.1} parent=11 // pred_fallthru
        _
    $region12: #{fused_frame_step.1} parent=5 // pred_fallthru
      _
    %p223 = scmp.lt.s32.totalorder %s12, 2
    // Predicated region
    $region21: #{fused_frame_step.1} parent=5 // pred_check
      %p224 = pneg %p223
    $region22: #{fused_frame_step.1} parent=5 // pred_check_branch
      %226 = sbr.rel (%p224) target = $region24
    $region23: #{fused_frame_step.1} parent=5 // pred_region
      // Predicated region
      $region25: #{fused_frame_step.1} parent=23 // pred_check
        %p227 = pneg %p46
      $region26: #{fused_frame_step.1} parent=23 // pred_check_branch
        %229 = sbr.rel (%p227) target = $region28
      $region27: #{fused_frame_step.1} parent=23 // pred_region
        %s230 = smul.u32 3, %s20
        %p231 = scmp.lt.s32.totalorder %s19, 1
        %s232 = scalar_select %p231, %s19, 1
        %p233 = scmp.lt.s32.totalorder %s230, 2
        %s234 = scalar_select %p233, %s230, 2
        %s235 = smul.addr %s232, 3
        %s236 = sadd.s32 %s234, %s235
        %s237 = smul.addr %s236, 4
        %s238 = scalar_lea.vmem %s0, %s237
        %s239 = smul.u32 3, %s20
      $region28: #{fused_frame_step.1} parent=23 // pred_fallthru
        _
      // Predicated region
      $region29: #{fused_frame_step.1} parent=23 // pred_check
        %p240 = pneg %p74
      $region30: #{fused_frame_step.1} parent=23 // pred_check_branch
        %242 = sbr.rel (%p240) target = $region32
      $region31: #{fused_frame_step.1} parent=23 // pred_region
        %s243 = smul.u32 3, %s20
        %p244 = scmp.lt.s32.totalorder %s19, 1
        %s245 = scalar_select %p244, %s19, 1
        %p246 = scmp.lt.s32.totalorder %s243, 2
        %s247 = scalar_select %p246, %s243, 2
        %s248 = smul.addr %s245, 3
        %s249 = sadd.s32 %s247, %s248
        %s250 = smul.addr %s249, 8
        %s251 = scalar_lea.vmem %s1, %s250
        %s252 = smul.u32 3, %s20
      $region32: #{fused_frame_step.1} parent=23 // pred_fallthru
        _
      // Predicated region
      $region33: #{fused_frame_step.1} parent=23 // pred_check
        %p253 = pneg %p100
      $region34: #{fused_frame_step.1} parent=23 // pred_check_branch
        %255 = sbr.rel (%p253) target = $region36
      $region35: #{fused_frame_step.1} parent=23 // pred_region
        %p256 = scmp.lt.s32.totalorder %s19, 1
        %s257 = scalar_select %p256, %s19, 1
        %s258 = scalar_lea.vmem %s2, %s257
      $region36: #{fused_frame_step.1} parent=23 // pred_fallthru
        _
      // Predicated region
      $region37: #{fused_frame_step.1} parent=23 // pred_check
        %p259 = pneg %p126
      $region38: #{fused_frame_step.1} parent=23 // pred_check_branch
        %261 = sbr.rel (%p259) target = $region40
      $region39: #{fused_frame_step.1} parent=23 // pred_region
        %p262 = scmp.lt.s32.totalorder %s19, 1
        %s263 = scalar_select %p262, %s19, 1
        %s264 = smul.addr %s263, 2
        %s265 = smul.addr %s264, 8
        %s266 = scalar_lea.vmem %s3, %s265
      $region40: #{fused_frame_step.1} parent=23 // pred_fallthru
        _
    $region24: #{fused_frame_step.1} parent=5 // pred_fallthru
      _
    %p267 = scmp.le.s32.totalorder 1, %s12
    %p268 = scmp.lt.s32.totalorder %s12, 3
    %p269 = pnand %p267, %p268
    %p270 = pneg %p269
    // Predicated region
    $region41: #{fused_frame_step.1} parent=5 // pred_check
      _
    $region42: #{fused_frame_step.1} parent=5 // pred_check_branch
      %272 = sbr.rel (%p269) target = $region44
    $region43: #{fused_frame_step.1} parent=5 // pred_region
      %s273 = ssub.s32 %s12, 1
      %s274 = smul.u32 3, %s22
      %p275 = scmp.lt.s32.totalorder %s21, 1
      %s276 = scalar_select %p275, %s21, 1
      %p277 = scmp.lt.s32.totalorder %s274, 2
      %s278 = scalar_select %p277, %s274, 2
      %s279 = smul.addr %s276, 3
      %s280 = sadd.s32 %s278, %s279
      %s281 = smul.addr %s280, 4
      %s282 = scalar_lea.vmem %s0, %s281
      %p283 = pneg %p52
      %p284 = pneg %p49
      %s285 = smul.u32 3, %s22
      %p286 = scmp.lt.s32.totalorder %s21, 1
      %s287 = scalar_select %p286, %s21, 1
      %p288 = scmp.lt.s32.totalorder %s285, 2
      %s289 = scalar_select %p288, %s285, 2
      %s290 = smul.addr %s287, 3
      %s291 = sadd.s32 %s289, %s290
      %s292 = smul.addr %s291, 8
      %s293 = scalar_lea.vmem %s1, %s292
      %p294 = pneg %p80
      %p295 = pneg %p77
      %p296 = scmp.lt.s32.totalorder %s21, 1
      %s297 = scalar_select %p296, %s21, 1
      %s298 = scalar_lea.vmem %s2, %s297
      %p299 = pneg %p106
      %p300 = pneg %p103
      %p301 = scmp.lt.s32.totalorder %s21, 1
      %s302 = scalar_select %p301, %s21, 1
      %s303 = smul.addr %s302, 2
      %s304 = smul.addr %s303, 8
      %s305 = scalar_lea.vmem %s3, %s304
      %p306 = pneg %p132
      %p307 = pneg %p129
      %p308 = pneg %p153
      %p309 = pneg %p150
      %p310 = pneg %p174
      %p311 = pneg %p171
      %p312 = pneg %p202
      %p313 = pneg %p199
      %s314 = smul.u32 3, %s22
      %p315 = scmp.lt.s32.totalorder %s21, 1
      %s316 = scalar_select %p315, %s21, 1
      %p317 = scmp.lt.s32.totalorder %s314, 2
      %s318 = scalar_select %p317, %s314, 2
      %s319 = smul.addr %s316, 3
      %s320 = sadd.s32 %s318, %s319
      %s321 = smul.addr %s320, 8
      %s322 = scalar_lea.vmem %s6, %s321
      %s323 = smul.u32 3, %s22
      %p324 = scmp.lt.s32.totalorder %s21, 1
      %s325 = scalar_select %p324, %s21, 1
      %p326 = scmp.lt.s32.totalorder %s323, 2
      %s327 = scalar_select %p326, %s323, 2
      %s328 = smul.addr %s325, 3
      %s329 = sadd.s32 %s327, %s328
      %s330 = smul.addr %s329, 4
      %s331 = scalar_lea.vmem %s0, %s330
      %s332 = smul.u32 3, %s22
      %s333 = smul.u32 3, %s22
      %p334 = scmp.lt.s32.totalorder %s21, 1
      %s335 = scalar_select %p334, %s21, 1
      %p336 = scmp.lt.s32.totalorder %s333, 2
      %s337 = scalar_select %p336, %s333, 2
      %s338 = smul.addr %s335, 3
      %s339 = sadd.s32 %s337, %s338
      %s340 = smul.addr %s339, 8
      %s341 = scalar_lea.vmem %s1, %s340
      %s342 = smul.u32 3, %s22
      %p343 = scmp.lt.s32.totalorder %s21, 1
      %s344 = scalar_select %p343, %s21, 1
      %s345 = scalar_lea.vmem %s2, %s344
      %p346 = scmp.lt.s32.totalorder %s21, 1
      %s347 = scalar_select %p346, %s21, 1
      %s348 = smul.addr %s347, 2
      %s349 = smul.addr %s348, 8
      %s350 = scalar_lea.vmem %s3, %s349
      %s351 = smul.u32 3, %s22
      %p352 = scmp.lt.s32.totalorder %s21, 1
      %s353 = scalar_select %p352, %s21, 1
      %p354 = scmp.lt.s32.totalorder %s351, 2
      %s355 = scalar_select %p354, %s351, 2
      %s356 = smul.addr %s353, 3
      %s357 = sadd.s32 %s355, %s356
      %s358 = smul.addr %s357, 8
      %s359 = scalar_lea.vmem %s6, %s358
      %s360 = smul.u32 3, %s22
      %v362 = vld [vmem:[%s345] sm:$0x1]
      %v363 = vld [vmem:[%s331] sm:$0xf]
      %v364 = vld [vmem:[%s331 + $0x4] sm:$0xf]
      %v365 = vld [vmem:[%s331 + $0x8] sm:$0xf]
      %v366 = vld [vmem:[%s4] sm:$0xf]
      %v367 = vld [vmem:[%s4 + $0x4] sm:$0xf]
      %v368 = vld [vmem:[%s4 + $0x8] sm:$0xf]
      %v369 = vld [vmem:[%s4 + $0xc] sm:$0xf]
      %v371 = vlaneseq
      %v372 = vshrl.u32 %v371, 7
      %v373 = vsub.s32 0, %v372
      %v374 = vrot.slane %v362, %v373
      %v379 = vunpack.c.l.b16 %v363
      %v380 = vunpack.c.l.b16 %v364
      %v381 = vunpack.c.l.b16 %v365
      %v382 = vpack.c.b16 %v380, %v379
      %v383 = vpack.c.b16 %v381, %v381
      %v388 = vunpack.c.l.b16 %v366
      %v389 = vunpack.c.l.b16 %v367
      %v390 = vunpack.c.l.b16 %v368
      %v391 = vunpack.c.l.b16 %v369
      %v392 = vpack.c.b16 %v389, %v388
      %v393 = vpack.c.b16 %v391, %v390
      %vm396 = vcmask 261120
      %v398 = vsel %vm396, %v382, 0
      %v401 = vsel %vm396, %v383, 0
      %403 = vmatprep.subr.bf16.mxu0 0
      %404 = vmatpush1.bf16.msra.mxu0 %v392
      %405 = vmatprep.subr.bf16.mxu0 0
      %406 = vmatpush1.bf16.msra.mxu0 %v393
      %407 = vmatprep.subr.bf16.mxu0 0
      %408 = vmatpush1.bf16.msra.mxu0 0
      %409 = vmatprep.subr.bf16.mxu0 0
      %410 = vmatpush1.bf16.msra.mxu0 0
      %411 = vmatprep.subr.bf16.mxu0 0
      %412 = vmatpush1.bf16.msra.mxu0 0
      %413 = vmatprep.subr.bf16.mxu0 0
      %414 = vmatpush1.bf16.msra.mxu0 0
      %415 = vmatprep.subr.bf16.mxu0 0
      %416 = vmatpush1.bf16.msra.mxu0 0
      %417 = vmatprep.subr.bf16.mxu0 0
      %418 = vmatpush1.bf16.msra.mxu0 0
      %419 = vmatprep.subr.bf16.mxu0 0
      %420 = vmatpush1.bf16.msra.mxu0 0
      %421 = vmatprep.subr.bf16.mxu0 0
      %422 = vmatpush1.bf16.msra.mxu0 0
      %423 = vmatprep.subr.bf16.mxu0 0
      %424 = vmatpush1.bf16.msra.mxu0 0
      %425 = vmatprep.subr.bf16.mxu0 0
      %426 = vmatpush1.bf16.msra.mxu0 0
      %427 = vmatprep.subr.bf16.mxu0 0
      %428 = vmatpush1.bf16.msra.mxu0 0
      %429 = vmatprep.subr.bf16.mxu0 0
      %430 = vmatpush1.bf16.msra.mxu0 0
      %431 = vmatprep.subr.bf16.mxu0 0
      %432 = vmatpush1.bf16.msra.mxu0 0
      %433 = vmatprep.subr.bf16.mxu0 0
      %434 = vmatpush1.bf16.msra.mxu0 0
      %435 = vmatprep.mubr.bf16.mxu0 0
      %436 = vmatmul.mubr.bf16.gmra.mrb[0].mxu0 %v398
      %v437 = vpop.f32.mrb[0].mxu0
      %v438 = vadd.f32 %v374, %v437
      %v439 = vpop.f32.mrb[0].mxu0
      %v440 = vpop.f32.mrb[0].mxu0
      %v441 = vadd.f32 %v374, %v440
      %v442 = vpop.f32.mrb[0].mxu0
      %443 = vmatprep.mubr.bf16.mxu0 0
      %444 = vmatmul.mubr.bf16.gmra.mrb[0].mxu0 %v401
      %v445 = vpop.f32.mrb[0].mxu0
      %v446 = vadd.f32 %v374, %v445
      %v447 = vpop.f32.mrb[0].mxu0
      %v448 = vpop.f32.mrb[0].mxu0
      %v449 = vpop.f32.mrb[0].mxu0
      %450 = vdwg.mxu0
      %v451 = vmax.f32 %v438, 0.0
      %v452 = vmax.f32 %v441, 0.0
      %v453 = vmax.f32 %v446, 0.0
      %v454 = vpack.c.bf16 %v452, %v451
      %v455 = vpack.c.bf16 %v453, %v453
      %v456 = vld [vmem:[%s5] sm:$0xf]
      %v457 = vld [vmem:[%s5 + $0x4] sm:$0xf]
      %v458 = vld [vmem:[%s5 + $0x8] sm:$0xf]
      %v459 = vld [vmem:[%s5 + $0xc] sm:$0xf]
      %v460 = vld [vmem:[%s341] sm:$0xff]
      %v461 = vld [vmem:[%s341 + $0x8] sm:$0xff]
      %v462 = vld [vmem:[%s341 + $0x10] sm:$0xff]
      %v463 = vld [vmem:[%s350] sm:$0xff]
      %v464 = vld [vmem:[%s350 + $0x8] sm:$0xff]
      %vm465 = vcmask 130048
      %v467 = vsel %vm465, %v460, 0
      %v470 = vsel %vm465, %v461, 0
      %v473 = vsel %vm465, %v462, 0
      %475 = vmatprep.subr.mxu0 0.0
      %476 = vmatpush1.msra.mxu0 %v463
      %477 = vmatprep.subr.mxu0 0.0
      %478 = vmatpush1.msra.mxu0 %v464
      %479 = vmatprep.subr.mxu0 0.0
      %480 = vmatpush1.msra.mxu0 0.0
      %481 = vmatprep.subr.mxu0 0.0
      %482 = vmatpush1.msra.mxu0 0.0
      %483 = vmatprep.subr.mxu0 0.0
      %484 = vmatpush1.msra.mxu0 0.0
      %485 = vmatprep.subr.mxu0 0.0
      %486 = vmatpush1.msra.mxu0 0.0
      %487 = vmatprep.subr.mxu0 0.0
      %488 = vmatpush1.msra.mxu0 0.0
      %489 = vmatprep.subr.mxu0 0.0
      %490 = vmatpush1.msra.mxu0 0.0
      %491 = vmatprep.subr.mxu0 0.0
      %492 = vmatpush1.msra.mxu0 0.0
      %493 = vmatprep.subr.mxu0 0.0
      %494 = vmatpush1.msra.mxu0 0.0
      %495 = vmatprep.subr.mxu0 0.0
      %496 = vmatpush1.msra.mxu0 0.0
      %497 = vmatprep.subr.mxu0 0.0
      %498 = vmatpush1.msra.mxu0 0.0
      %499 = vmatprep.subr.mxu0 0.0
      %500 = vmatpush1.msra.mxu0 0.0
      %501 = vmatprep.subr.mxu0 0.0
      %502 = vmatpush1.msra.mxu0 0.0
      %503 = vmatprep.subr.mxu0 0.0
      %504 = vmatpush1.msra.mxu0 0.0
      %505 = vmatprep.subr.mxu0 0.0
      %506 = vmatpush1.msra.mxu0 0.0
      %507 = vmatprep.subr.mxu0 0.0
      %508 = vmatpush1.msra.mxu0 0.0
      %509 = vmatprep.subr.mxu0 0.0
      %510 = vmatpush1.msra.mxu0 0.0
      %511 = vmatprep.subr.mxu0 0.0
      %512 = vmatpush1.msra.mxu0 0.0
      %513 = vmatprep.subr.mxu0 0.0
      %514 = vmatpush1.msra.mxu0 0.0
      %515 = vmatprep.subr.mxu0 0.0
      %516 = vmatpush1.msra.mxu0 0.0
      %517 = vmatprep.subr.mxu0 0.0
      %518 = vmatpush1.msra.mxu0 0.0
      %519 = vmatprep.subr.mxu0 0.0
      %520 = vmatpush1.msra.mxu0 0.0
      %521 = vmatprep.subr.mxu0 0.0
      %522 = vmatpush1.msra.mxu0 0.0
      %523 = vmatprep.subr.mxu0 0.0
      %524 = vmatpush1.msra.mxu0 0.0
      %525 = vmatprep.subr.mxu0 0.0
      %526 = vmatpush1.msra.mxu0 0.0
      %527 = vmatprep.subr.mxu0 0.0
      %528 = vmatpush1.msra.mxu0 0.0
      %529 = vmatprep.subr.mxu0 0.0
      %530 = vmatpush1.msra.mxu0 0.0
      %531 = vmatprep.subr.mxu0 0.0
      %532 = vmatpush1.msra.mxu0 0.0
      %533 = vmatprep.subr.mxu0 0.0
      %534 = vmatpush1.msra.mxu0 0.0
      %535 = vmatprep.subr.mxu0 0.0
      %536 = vmatpush1.msra.mxu0 0.0
      %537 = vmatprep.subr.mxu0 0.0
      %538 = vmatpush1.msra.mxu0 0.0
      %539 = vmatprep.mubr.f32.mxu0 0.0
      %540 = vmatmul.mubr.f32.gmra.mrb[0].mxu0 %v467
      %v541 = vpop.f32.mrb[0].mxu0
      %v542 = vadd.f32 0.0, %v541
      %v543 = vpop.f32.mrb[0].mxu0
      %544 = vmatprep.mubr.f32.mxu0 0.0
      %545 = vmatmul.mubr.f32.gmra.mrb[0].mxu0 %v470
      %v546 = vpop.f32.mrb[0].mxu0
      %v547 = vadd.f32 0.0, %v546
      %v548 = vpop.f32.mrb[0].mxu0
      %549 = vmatprep.mubr.f32.mxu0 0.0
      %550 = vmatmul.mubr.f32.gmra.mrb[0].mxu0 %v473
      %v551 = vpop.f32.mrb[0].mxu0
      %v552 = vadd.f32 0.0, %v551
      %v553 = vpop.f32.mrb[0].mxu0
      %554 = vdwg.mxu0
      %v559 = vunpack.c.l.b16 %v456
      %v560 = vunpack.c.l.b16 %v457
      %v561 = vunpack.c.l.b16 %v458
      %v562 = vunpack.c.l.b16 %v459
      %v563 = vpack.c.b16 %v560, %v559
      %v564 = vpack.c.b16 %v562, %v561
      %v568 = vsel %vm396, %v454, 0
      %v571 = vsel %vm396, %v455, 0
      %573 = vmatprep.subr.bf16.mxu0 0
      %574 = vmatpush1.bf16.msra.mxu0 %v563
      %575 = vmatprep.subr.bf16.mxu0 0
      %576 = vmatpush1.bf16.msra.mxu0 %v564
      %577 = vmatprep.subr.bf16.mxu0 0
      %578 = vmatpush1.bf16.msra.mxu0 0
      %579 = vmatprep.subr.bf16.mxu0 0
      %580 = vmatpush1.bf16.msra.mxu0 0
      %581 = vmatprep.subr.bf16.mxu0 0
      %582 = vmatpush1.bf16.msra.mxu0 0
      %583 = vmatprep.subr.bf16.mxu0 0
      %584 = vmatpush1.bf16.msra.mxu0 0
      %585 = vmatprep.subr.bf16.mxu0 0
      %586 = vmatpush1.bf16.msra.mxu0 0
      %587 = vmatprep.subr.bf16.mxu0 0
      %588 = vmatpush1.bf16.msra.mxu0 0
      %589 = vmatprep.subr.bf16.mxu0 0
      %590 = vmatpush1.bf16.msra.mxu0 0
      %591 = vmatprep.subr.bf16.mxu0 0
      %592 = vmatpush1.bf16.msra.mxu0 0
      %593 = vmatprep.subr.bf16.mxu0 0
      %594 = vmatpush1.bf16.msra.mxu0 0
      %595 = vmatprep.subr.bf16.mxu0 0
      %596 = vmatpush1.bf16.msra.mxu0 0
      %597 = vmatprep.subr.bf16.mxu0 0
      %598 = vmatpush1.bf16.msra.mxu0 0
      %599 = vmatprep.subr.bf16.mxu0 0
      %600 = vmatpush1.bf16.msra.mxu0 0
      %601 = vmatprep.subr.bf16.mxu0 0
      %602 = vmatpush1.bf16.msra.mxu0 0
      %603 = vmatprep.subr.bf16.mxu0 0
      %604 = vmatpush1.bf16.msra.mxu0 0
      %605 = vmatprep.mubr.bf16.mxu0 0
      %606 = vmatmul.mubr.bf16.gmra.mrb[0].mxu0 %v568
      %v607 = vpop.f32.mrb[0].mxu0
      %v608 = vadd.f32 %v542, %v607
      %v609 = vpop.f32.mrb[0].mxu0
      %v610 = vpop.f32.mrb[0].mxu0
      %v611 = vadd.f32 %v547, %v610
      %v612 = vpop.f32.mrb[0].mxu0
      %613 = vmatprep.mubr.bf16.mxu0 0
      %614 = vmatmul.mubr.bf16.gmra.mrb[0].mxu0 %v571
      %v615 = vpop.f32.mrb[0].mxu0
      %v616 = vadd.f32 %v552, %v615
      %v617 = vpop.f32.mrb[0].mxu0
      %v618 = vpop.f32.mrb[0].mxu0
      %v619 = vpop.f32.mrb[0].mxu0
      %620 = vdwg.mxu0
      %vm621 = vcmask 31744
      %v622 = vsel %vm621, %v608, -inf
      %623 = vmax.xlane.f32.xlu0 %v622
      %v624 = vpop.xlane.xlu0 %623
      %v625 = vsel %vm621, %v611, -inf
      %626 = vmax.xlane.f32.xlu0 %v625
      %v627 = vpop.xlane.xlu0 %626
      %v628 = vsel %vm621, %v616, -inf
      %629 = vmax.xlane.f32.xlu0 %v628
      %v630 = vpop.xlane.xlu0 %629
      %v631 = vxor.u32 %v624, 2147483648
      %v632 = vxor.u32 %v627, 2147483648
      %v633 = vxor.u32 %v630, 2147483648
      %v634 = vmul.f32 %v631, 1.442695
      %v635 = vpow.pop %v634
      %v636 = vmul.f32 %v632, 1.442695
      %v637 = vpow.pop %v636
      %v638 = vmul.f32 %v633, 1.442695
      %v639 = vpow.pop %v638
      %v640 = vadd.f32 %v635, 1.0
      %v641 = vadd.f32 %v637, 1.0
      %v642 = vadd.f32 %v639, 1.0
      %v643 = vrcp.pop %v640
      %v644 = vmul.f32 1.0, %v643
      %v645 = vrcp.pop %v641
      %v646 = vmul.f32 1.0, %v645
      %v647 = vrcp.pop %v642
      %v648 = vmul.f32 1.0, %v647
      %s649 = smul.u32 %s22, 24
      %v650 = vlaneseq
      %v651 = vshrl.u32 %v650, 7
      %v652 = vadd.s32 %v651, 8
      %v653 = vadd.s32 %v651, 16
      %v654 = vstv %s649
      %v655 = vadd.s32 %v654, %v651
      %v656 = vadd.s32 %v654, %v652
      %v657 = vadd.s32 %v654, %v653
      %vm658 = vcmp.lt.s32.totalorder %v655, 8
      %vm659 = vcmp.lt.s32.totalorder %v656, 8
      %vm660 = vcmp.lt.s32.totalorder %v657, 8
      %v661 = vmul.f32 %v460, 0.6
      %v662 = vmul.f32 %v461, 0.6
      %v663 = vmul.f32 %v462, 0.6
      %v664 = vmax.f32 %v661, %v644
      %v665 = vmax.f32 %v662, %v646
      %v666 = vmax.f32 %v663, %v648
      %v667 = vsel %vm658, %v664, %v644
      %v668 = vsel %vm659, %v665, %v646
      %v669 = vsel %vm660, %v666, %v648
      %v670 = vlaneseq
      %v671 = vand.u32 %v670, 127
      %vm672 = vcmp.eq.s32.totalorder %v671, 49
      %674 = vset.pattern.permute.xlu0 12
      %675 = vperm.xlu0 %674, %v667
      %v676 = vpop.permute.xlu0 %675
      %679 = vset.pattern.permute.xlu0 12
      %680 = vperm.xlu0 %679, %v668
      %v681 = vpop.permute.xlu0 %680
      %684 = vset.pattern.permute.xlu0 12
      %685 = vperm.xlu0 %684, %v669
      %v686 = vpop.permute.xlu0 %685
      %v688 = vsel %vm672, %v676, %v608
      %v689 = vsel %vm672, %v681, %v611
      %v690 = vsel %vm672, %v686, %v616
      %691 = vst [vmem:[%s359] sm:$0xff] %v688
      %692 = vst [vmem:[%s359 + $0x8] sm:$0xff] %v689
      %693 = vst [vmem:[%s359 + $0x10] sm:$0xff] %v690
      %s694 = smul.u32 3, %s22
      %p695 = scmp.lt.s32.totalorder %s21, 1
      %s696 = scalar_select %p695, %s21, 1
      %p697 = scmp.lt.s32.totalorder %s694, 2
      %s698 = scalar_select %p697, %s694, 2
      %s699 = smul.addr %s696, 3
      %s700 = sadd.s32 %s698, %s699
      %s701 = smul.addr %s700, 8
      %s702 = scalar_lea.vmem %s6, %s701
      // Predicated region
      $region45: #{fused_frame_step.1} parent=43 // pred_check
        %p703 = pneg %p199
      $region46: #{fused_frame_step.1} parent=43 // pred_check_branch
        %705 = sbr.rel (%p703) target = $region48
      $region47: #{fused_frame_step.1} parent=43 // pred_region
        %s706 = smul.u32 3, %s22
      $region48: #{fused_frame_step.1} parent=43 // pred_fallthru
        _
    $region44: #{fused_frame_step.1} parent=5 // pred_fallthru
      _
    %p707 = scmp.le.s32.totalorder 2, %s12
    // Predicated region
    $region49: #{fused_frame_step.1} parent=5 // pred_check
      %p708 = pneg %p707
    $region50: #{fused_frame_step.1} parent=5 // pred_check_branch
      %710 = sbr.rel (%p708) target = $region52
    $region51: #{fused_frame_step.1} parent=5 // pred_region
      %s711 = ssub.s32 %s12, 2
      // Predicated region
      $region53: #{fused_frame_step.1} parent=51 // pred_check
        %p712 = pneg %p205
      $region54: #{fused_frame_step.1} parent=51 // pred_check_branch
        %714 = sbr.rel (%p712) target = $region56
      $region55: #{fused_frame_step.1} parent=51 // pred_region
        %s715 = smul.u32 3, %s24
        %p716 = scmp.lt.s32.totalorder %s23, 1
        %s717 = scalar_select %p716, %s23, 1
        %p718 = scmp.lt.s32.totalorder %s715, 2
        %s719 = scalar_select %p718, %s715, 2
        %s720 = smul.addr %s717, 3
        %s721 = sadd.s32 %s719, %s720
        %s722 = smul.addr %s721, 8
        %s723 = scalar_lea.vmem %s6, %s722
      $region56: #{fused_frame_step.1} parent=51 // pred_fallthru
        _
    $region52: #{fused_frame_step.1} parent=5 // pred_fallthru
      _
  $region6: #{fused_frame_step.1} parent=0 // loop_footer
    %s16 = sadd.s32 1, %s12
  $region7: #{fused_frame_step.1} parent=0 // loop_footer_branch
    %11 = sbr.rel target = $region3
  $region8: #{fused_frame_step.1} parent=0 // loop_exit
    _

</llo_original>
